<compile_context>
chip_gen: v7x
topology: tpu7x:2x2x1
jax: 0.10.0
libtpu: 0.0.40
codegen_flags: <defaults>
</compile_context>

<pallas_src>
import functools

import jax
import jax.numpy as jnp
from jax.experimental import pallas as pl
from jax.experimental.pallas import tpu as pltpu


LANE = 128  # TPU lane width; hidden/output feature dims are padded to this.


def _round_up(x, m):
    return (x + m - 1) // m * m


# ----------------------------------------------------------------------------
# Pallas kernel: fused 4-layer MLP  (Linear -> ReLU) x3 -> Linear
#   x tile:   (TILE_N, D_in)        bf16 (or f32)
#   weights:  (in, out) resident    bf16 (or f32), padded to 128-lane widths
#   biases:   (1, out) resident     f32
#   out tile: (TILE_N, OUT_PAD)     f32 (lane-dense, unmasked stores)
# ----------------------------------------------------------------------------
def _mlp_kernel(x_ref,
                w1_ref, b1_ref,
                w2_ref, b2_ref,
                w3_ref, b3_ref,
                w4_ref, b4_ref,
                o_ref):
    cd = w1_ref.dtype  # compute dtype for MXU inputs (bf16 on v6e/v7x)

    h = jnp.dot(x_ref[...], w1_ref[...], preferred_element_type=jnp.float32)
    h = jnp.maximum(h + b1_ref[...], 0.0).astype(cd)

    h = jnp.dot(h, w2_ref[...], preferred_element_type=jnp.float32)
    h = jnp.maximum(h + b2_ref[...], 0.0).astype(cd)

    h = jnp.dot(h, w3_ref[...], preferred_element_type=jnp.float32)
    h = jnp.maximum(h + b3_ref[...], 0.0).astype(cd)

    out = jnp.dot(h, w4_ref[...], preferred_element_type=jnp.float32)
    o_ref[...] = (out + b4_ref[...]).astype(o_ref.dtype)


# ----------------------------------------------------------------------------
# Wrapper: batch-tiled grid, resident weights, lane-dense padded output.
# ----------------------------------------------------------------------------
@functools.partial(jax.jit, static_argnames=("d_in", "d_out", "tile_n"))
def mlp_forward(x, params, *, d_in, d_out, tile_n=512):
    (w1, b1), (w2, b2), (w3, b3), (w4, b4) = params
    compute_dtype = w1.dtype
    out_pad = w4.shape[1]  # padded output width (128)

    # x.view(-1, D_in)
    x_flat = x.reshape(-1, d_in).astype(compute_dtype)
    n = x_flat.shape[0]

    # Tile: at most `tile_n` rows, at least a sublane-aligned cover of n.
    # (For tiny demo batches this collapses to a single grid step; for large N
    #  the 512-row default sits near the measured ~85%-of-roofline sweet spot.)
    tn = min(tile_n, _round_up(n, 8))
    n_pad = _round_up(n, tn)
    if n_pad != n:
        x_flat = jnp.pad(x_flat, ((0, n_pad - n), (0, 0)))

    grid = (n_pad // tn,)

    x_spec = pl.BlockSpec((tn, d_in), lambda i: (i, 0))
    out_spec = pl.BlockSpec((tn, out_pad), lambda i: (i, 0))

    def _resident(a):
        # Constant block index across the grid -> DMA'd once, stays in VMEM.
        return pl.BlockSpec(a.shape, lambda i: (0, 0))

    consts = (w1, b1, w2, b2, w3, b3, w4, b4)

    out = pl.pallas_call(
        _mlp_kernel,
        grid=grid,
        in_specs=[x_spec] + [_resident(a) for a in consts],
        out_specs=out_spec,
        out_shape=jax.ShapeDtypeStruct((n_pad, out_pad), jnp.float32),
        compiler_params=pltpu.CompilerParams(
            dimension_semantics=("parallel",),  # shard rows across v7x's 2 TCs
        ),
    )(x_flat, *consts)

    # Strip row padding and the lane padding of the output.
    return out[:n, :d_out]


# ----------------------------------------------------------------------------
# Parameter setup (plain JAX glue): Linear init + spectral norm + lane padding
# ----------------------------------------------------------------------------
def _linear_params(key, fan_in, fan_out):
    """Deterministic Linear init (uniform +-1/sqrt(fan_in), like PyTorch)."""
    kw, kb = jax.random.split(key)
    bound = 1.0 / jnp.sqrt(jnp.float32(fan_in))
    # PyTorch stores W as (out, in); keep that for spectral norm, transpose later.
    w_pt = jax.random.uniform(kw, (fan_out, fan_in), jnp.float32, -bound, bound)
    b = jax.random.uniform(kb, (1, fan_out), jnp.float32, -bound, bound)
    return w_pt, b


def _spectral_normalize(key, w_pt, n_power_iterations=1, eps=1e-12):
    """torch.nn.utils.spectral_norm semantics: power iteration, W / sigma."""
    out_f, in_f = w_pt.shape
    u = jax.random.normal(key, (out_f,), jnp.float32)
    u = u / (jnp.linalg.norm(u) + eps)
    v = jnp.zeros((in_f,), jnp.float32)
    for _ in range(n_power_iterations):
        v = w_pt.T @ u
        v = v / (jnp.linalg.norm(v) + eps)
        u = w_pt @ v
        u = u / (jnp.linalg.norm(u) + eps)
    sigma = u @ (w_pt @ v)
    return w_pt / sigma


def make_net_params(key, d_in, h, d_out, *, compute_dtype=jnp.bfloat16):
    """Builds spectral-normalized weights, stored (in, out) and zero-padded to
    128-lane feature widths. Padding is exact: padded hidden units get zero
    weight and zero bias (ReLU(0)=0) and feed zero rows of the next layer."""
    h_pad = _round_up(h, LANE)
    o_pad = _round_up(d_out, LANE)

    sizes = [(d_in, h), (h, h), (h, h), (h, d_out)]
    pads = [(d_in, h_pad), (h_pad, h_pad), (h_pad, h_pad), (h_pad, o_pad)]

    keys = jax.random.split(key, 2 * len(sizes))
    params = []
    for i, ((fi, fo), (pi, po)) in enumerate(zip(sizes, pads)):
        w_pt, b = _linear_params(keys[2 * i], fi, fo)
        w_sn = _spectral_normalize(keys[2 * i + 1], w_pt).T  # (in, out)
        w_padded = jnp.zeros((pi, po), jnp.float32).at[:fi, :fo].set(w_sn)
        b_padded = jnp.zeros((1, po), jnp.float32).at[:, :fo].set(b)
        params.append((w_padded.astype(compute_dtype), b_padded))  # bias stays f32
    return tuple(params)


# ----------------------------------------------------------------------------
# Demo
# ----------------------------------------------------------------------------
if __name__ == "__main__":
    D_IN, H, D_OUT = 16, 32, 8

    key = jax.random.PRNGKey(0)
    k_params, k_x = jax.random.split(key)

    params = make_net_params(k_params, D_IN, H, D_OUT)

    # Input (2, 4, 16, 16); forward flattens it to (-1, D_in) = (128, 16).
    x = jax.random.normal(k_x, (2, 4, 16, D_IN), jnp.float32)

    out = mlp_forward(x, params, d_in=D_IN, d_out=D_OUT)
    out = jax.block_until_ready(out)

    # Reference check in plain JAX: identical math (same padded bf16 weights,
    # f32 accumulation) so the comparison is tight.
    def ref(x, params):
        cd = params[0][0].dtype
        y = x.reshape(-1, D_IN).astype(cd)
        for i, (w, b) in enumerate(params):
            y = jnp.dot(y, w, preferred_element_type=jnp.float32) + b
            if i < len(params) - 1:
                y = jnp.maximum(y, 0.0).astype(cd)
        return y[:, :D_OUT]

    ref_out = ref(x, params)
    assert out.shape == (2 * 4 * 16, D_OUT)
    assert jnp.allclose(out, ref_out, atol=2e-3), "mismatch vs reference"

    print("KERNEL_OK")
</pallas_src>

<mosaic_0001>
module attributes {stable_mosaic.version = 11 : i64} {
  func.func @_mlp_kernel(%arg0: i32, %arg1: memref<128x16xbf16, #tpu.memory_space<vmem>>, %arg2: memref<16x128xbf16, #tpu.memory_space<vmem>>, %arg3: memref<1x128xf32, #tpu.memory_space<vmem>>, %arg4: memref<128x128xbf16, #tpu.memory_space<vmem>>, %arg5: memref<1x128xf32, #tpu.memory_space<vmem>>, %arg6: memref<128x128xbf16, #tpu.memory_space<vmem>>, %arg7: memref<1x128xf32, #tpu.memory_space<vmem>>, %arg8: memref<128x128xbf16, #tpu.memory_space<vmem>>, %arg9: memref<1x128xf32, #tpu.memory_space<vmem>>, %arg10: memref<128x128xf32, #tpu.memory_space<vmem>>) attributes {dimension_semantics = [#tpu.dimension_semantics<parallel>], iteration_bounds = array<i64: 1>, scalar_prefetch = 0 : i64, scratch_operands = 0 : i64, tpu.core_type = #tpu.core_type<tc>, window_params = [{transform_indices = @transform_0, window_bounds = array<i64: 128, 16>}, {pipeline_mode = #tpu.pipeline_mode<synchronous>, transform_indices = @transform_1, window_bounds = array<i64: 16, 128>}, {pipeline_mode = #tpu.pipeline_mode<synchronous>, transform_indices = @transform_2, window_bounds = array<i64: 1, 128>}, {pipeline_mode = #tpu.pipeline_mode<synchronous>, transform_indices = @transform_3, window_bounds = array<i64: 128, 128>}, {pipeline_mode = #tpu.pipeline_mode<synchronous>, transform_indices = @transform_4, window_bounds = array<i64: 1, 128>}, {pipeline_mode = #tpu.pipeline_mode<synchronous>, transform_indices = @transform_5, window_bounds = array<i64: 128, 128>}, {pipeline_mode = #tpu.pipeline_mode<synchronous>, transform_indices = @transform_6, window_bounds = array<i64: 1, 128>}, {pipeline_mode = #tpu.pipeline_mode<synchronous>, transform_indices = @transform_7, window_bounds = array<i64: 128, 128>}, {pipeline_mode = #tpu.pipeline_mode<synchronous>, transform_indices = @transform_8, window_bounds = array<i64: 1, 128>}, {transform_indices = @transform_9, window_bounds = array<i64: 128, 128>}]} {
    %c0 = arith.constant 0 : index
    %c0_0 = arith.constant 0 : index
    %0 = vector.load %arg1[%c0, %c0_0] : memref<128x16xbf16, #tpu.memory_space<vmem>>, vector<128x16xbf16>
    %c0_1 = arith.constant 0 : index
    %c0_2 = arith.constant 0 : index
    %1 = vector.load %arg2[%c0_1, %c0_2] : memref<16x128xbf16, #tpu.memory_space<vmem>>, vector<16x128xbf16>
    %cst = arith.constant dense<0.000000e+00> : vector<128x128xf32>
    %2 = tpu.matmul %0, %1, %cst {dimension_numbers = #tpu.dot_dimension_numbers<[1], [0], [0], [1], [0, 0, 1, 1], [], []>} : vector<128x16xbf16>, vector<16x128xbf16>, vector<128x128xf32> -> vector<128x128xf32>
    %c0_3 = arith.constant 0 : index
    %c0_4 = arith.constant 0 : index
    %3 = vector.load %arg3[%c0_3, %c0_4] : memref<1x128xf32, #tpu.memory_space<vmem>>, vector<1x128xf32>
    %4 = vector.broadcast %3 : vector<1x128xf32> to vector<128x128xf32>
    %5 = arith.addf %2, %4 : vector<128x128xf32>
    %cst_5 = arith.constant 0.000000e+00 : f32
    %6 = vector.broadcast %cst_5 : f32 to vector<128x128xf32>
    %7 = arith.maximumf %5, %6 : vector<128x128xf32>
    %8 = arith.truncf %7 : vector<128x128xf32> to vector<128x128xbf16>
    %c0_6 = arith.constant 0 : index
    %c0_7 = arith.constant 0 : index
    %9 = vector.load %arg4[%c0_6, %c0_7] : memref<128x128xbf16, #tpu.memory_space<vmem>>, vector<128x128xbf16>
    %cst_8 = arith.constant dense<0.000000e+00> : vector<128x128xf32>
    %10 = tpu.matmul %8, %9, %cst_8 {dimension_numbers = #tpu.dot_dimension_numbers<[1], [0], [0], [1], [0, 0, 1, 1], [], []>} : vector<128x128xbf16>, vector<128x128xbf16>, vector<128x128xf32> -> vector<128x128xf32>
    %c0_9 = arith.constant 0 : index
    %c0_10 = arith.constant 0 : index
    %11 = vector.load %arg5[%c0_9, %c0_10] : memref<1x128xf32, #tpu.memory_space<vmem>>, vector<1x128xf32>
    %12 = vector.broadcast %11 : vector<1x128xf32> to vector<128x128xf32>
    %13 = arith.addf %10, %12 : vector<128x128xf32>
    %cst_11 = arith.constant 0.000000e+00 : f32
    %14 = vector.broadcast %cst_11 : f32 to vector<128x128xf32>
    %15 = arith.maximumf %13, %14 : vector<128x128xf32>
    %16 = arith.truncf %15 : vector<128x128xf32> to vector<128x128xbf16>
    %c0_12 = arith.constant 0 : index
    %c0_13 = arith.constant 0 : index
    %17 = vector.load %arg6[%c0_12, %c0_13] : memref<128x128xbf16, #tpu.memory_space<vmem>>, vector<128x128xbf16>
    %cst_14 = arith.constant dense<0.000000e+00> : vector<128x128xf32>
    %18 = tpu.matmul %16, %17, %cst_14 {dimension_numbers = #tpu.dot_dimension_numbers<[1], [0], [0], [1], [0, 0, 1, 1], [], []>} : vector<128x128xbf16>, vector<128x128xbf16>, vector<128x128xf32> -> vector<128x128xf32>
    %c0_15 = arith.constant 0 : index
    %c0_16 = arith.constant 0 : index
    %19 = vector.load %arg7[%c0_15, %c0_16] : memref<1x128xf32, #tpu.memory_space<vmem>>, vector<1x128xf32>
    %20 = vector.broadcast %19 : vector<1x128xf32> to vector<128x128xf32>
    %21 = arith.addf %18, %20 : vector<128x128xf32>
    %cst_17 = arith.constant 0.000000e+00 : f32
    %22 = vector.broadcast %cst_17 : f32 to vector<128x128xf32>
    %23 = arith.maximumf %21, %22 : vector<128x128xf32>
    %24 = arith.truncf %23 : vector<128x128xf32> to vector<128x128xbf16>
    %c0_18 = arith.constant 0 : index
    %c0_19 = arith.constant 0 : index
    %25 = vector.load %arg8[%c0_18, %c0_19] : memref<128x128xbf16, #tpu.memory_space<vmem>>, vector<128x128xbf16>
    %cst_20 = arith.constant dense<0.000000e+00> : vector<128x128xf32>
    %26 = tpu.matmul %24, %25, %cst_20 {dimension_numbers = #tpu.dot_dimension_numbers<[1], [0], [0], [1], [0, 0, 1, 1], [], []>} : vector<128x128xbf16>, vector<128x128xbf16>, vector<128x128xf32> -> vector<128x128xf32>
    %c0_21 = arith.constant 0 : index
    %c0_22 = arith.constant 0 : index
    %27 = vector.load %arg9[%c0_21, %c0_22] : memref<1x128xf32, #tpu.memory_space<vmem>>, vector<1x128xf32>
    %28 = vector.broadcast %27 : vector<1x128xf32> to vector<128x128xf32>
    %29 = arith.addf %26, %28 : vector<128x128xf32>
    %c0_23 = arith.constant 0 : index
    %c0_24 = arith.constant 0 : index
    %30 = vector.load %arg10[%c0_23, %c0_24] : memref<128x128xf32, #tpu.memory_space<vmem>>, vector<128x128xf32>
    tpu.vector_store %arg10[%c0_23, %c0_24], %29 {strides = array<i32>} : memref<128x128xf32, #tpu.memory_space<vmem>>, vector<128x128xf32>,
    return
  }
  func.func @transform_0(%arg0: i32) -> (i32, i32) {
    %c0_i32 = arith.constant 0 : i32
    %c0_i32_0 = arith.constant 0 : i32
    return %arg0, %c0_i32 : i32, i32
  }
  func.func @transform_1(%arg0: i32) -> (i32, i32) {
    %c0_i32 = arith.constant 0 : i32
    %c0_i32_0 = arith.constant 0 : i32
    %c0_i32_1 = arith.constant 0 : i32
    return %c0_i32, %c0_i32_0 : i32, i32
  }
  func.func @transform_2(%arg0: i32) -> (i32, i32) {
    %c0_i32 = arith.constant 0 : i32
    %c0_i32_0 = arith.constant 0 : i32
    %c0_i32_1 = arith.constant 0 : i32
    return %c0_i32, %c0_i32_0 : i32, i32
  }
  func.func @transform_3(%arg0: i32) -> (i32, i32) {
    %c0_i32 = arith.constant 0 : i32
    %c0_i32_0 = arith.constant 0 : i32
    %c0_i32_1 = arith.constant 0 : i32
    return %c0_i32, %c0_i32_0 : i32, i32
  }
  func.func @transform_4(%arg0: i32) -> (i32, i32) {
    %c0_i32 = arith.constant 0 : i32
    %c0_i32_0 = arith.constant 0 : i32
    %c0_i32_1 = arith.constant 0 : i32
    return %c0_i32, %c0_i32_0 : i32, i32
  }
  func.func @transform_5(%arg0: i32) -> (i32, i32) {
    %c0_i32 = arith.constant 0 : i32
    %c0_i32_0 = arith.constant 0 : i32
    %c0_i32_1 = arith.constant 0 : i32
    return %c0_i32, %c0_i32_0 : i32, i32
  }
  func.func @transform_6(%arg0: i32) -> (i32, i32) {
    %c0_i32 = arith.constant 0 : i32
    %c0_i32_0 = arith.constant 0 : i32
    %c0_i32_1 = arith.constant 0 : i32
    return %c0_i32, %c0_i32_0 : i32, i32
  }
  func.func @transform_7(%arg0: i32) -> (i32, i32) {
    %c0_i32 = arith.constant 0 : i32
    %c0_i32_0 = arith.constant 0 : i32
    %c0_i32_1 = arith.constant 0 : i32
    return %c0_i32, %c0_i32_0 : i32, i32
  }
  func.func @transform_8(%arg0: i32) -> (i32, i32) {
    %c0_i32 = arith.constant 0 : i32
    %c0_i32_0 = arith.constant 0 : i32
    %c0_i32_1 = arith.constant 0 : i32
    return %c0_i32, %c0_i32_0 : i32, i32
  }
  func.func @transform_9(%arg0: i32) -> (i32, i32) {
    %c0_i32 = arith.constant 0 : i32
    %c0_i32_0 = arith.constant 0 : i32
    return %arg0, %c0_i32 : i32, i32
  }
}

</mosaic_0001>

<llo_original>
// kernel: mlp_forward.1
$region0: #{mlp_forward.1}
  #allocation0 [shape = 'u32[]', space=smem, size = 0x4, offset = 0x4, fixed_abs, tag = 'smem constant byte address 0x4 - core index']
  #allocation1 [shape = 'u32[144,128]{1,0:T(1,128)}', space=vmem, size = 0x12000, scoped, tag = 'internal scratch']
  %s0 = inlined_call_operand.vmem [shape: bf16[128,16], index: 0, kind: input, shape index: {}]
  %s1 = inlined_call_operand.hbm [shape: bf16[16,128], index: 1, kind: input, shape index: {}]
  %s2 = inlined_call_operand.vmem [shape: f32[1,128], index: 2, kind: input, shape index: {}]
  %s3 = inlined_call_operand.vmem [shape: bf16[128,128], index: 3, kind: input, shape index: {}]
  %s4 = inlined_call_operand.vmem [shape: f32[1,128], index: 4, kind: input, shape index: {}]
  %s5 = inlined_call_operand.vmem [shape: bf16[128,128], index: 5, kind: input, shape index: {}]
  %s6 = inlined_call_operand.vmem [shape: f32[1,128], index: 6, kind: input, shape index: {}]
  %s7 = inlined_call_operand.vmem [shape: bf16[128,128], index: 7, kind: input, shape index: {}]
  %s8 = inlined_call_operand.vmem [shape: f32[1,128], index: 8, kind: input, shape index: {}]
  %s9 = inlined_call_operand.vmem [shape: f32[128,128], index: 9, kind: output, shape index: {}]
  %s10 = sld [smem:[#allocation0]]
  $region50: #{mlp_forward.1} parent=0
    _
  %s12 = ssub.s32 1, %s10
  %s13 = scalar_select 0, %s12, %s10
  $region1: #{mlp_forward.1} parent=0
    #allocation2 [shape = 'u8[4096]{0}', space=vmem, size = 0x1000, scoped, tag = 'input window, operand 1, single buffered']
    #allocation3 [shape = 's32[1]{0}', space=sflag, size = 0x4, scoped, tag = 'scoped memory for mlp_forward.1']
    %14 = vsyncpa [#allocation3], 0
    // Predicated region
    $region2: #{mlp_forward.1} parent=1 // pred_check
      _
    $region3: #{mlp_forward.1} parent=1 // pred_check_branch
      %16 = sbr.rel (0) target = $region5
    $region4: #{mlp_forward.1} parent=1 // pred_region
      _
    $region5: #{mlp_forward.1} parent=1 // pred_fallthru
      _
    // Predicated region
    $region6: #{mlp_forward.1} parent=1 // pred_check
      _
    $region7: #{mlp_forward.1} parent=1 // pred_check_branch
      %18 = sbr.rel (0) target = $region9
    $region8: #{mlp_forward.1} parent=1 // pred_region
      %s20 = ssub.s32 128, 128
      %21 = vsyncadd [#allocation3], %s20
      %s22 = sshll.u32 [#allocation2], 4
      %s23 = int_to_ptr.vmem [resolvable:$true] %s22
      %28 = dma.hbm_to_vmem [thread:$0]  %s1, 128, %s23, [#allocation3], 64, 64, 4
    $region9: #{mlp_forward.1} parent=1 // pred_fallthru
      _
    // Predicated region
    $region10: #{mlp_forward.1} parent=1 // pred_check
      _
    $region11: #{mlp_forward.1} parent=1 // pred_check_branch
      %30 = sbr.rel (0) target = $region13
    $region12: #{mlp_forward.1} parent=1 // pred_region
      _
    $region13: #{mlp_forward.1} parent=1 // pred_fallthru
      _
    // Predicated region
    $region14: #{mlp_forward.1} parent=1 // pred_check
      _
    $region15: #{mlp_forward.1} parent=1 // pred_check_branch
      %32 = sbr.rel (0) target = $region17
    $region16: #{mlp_forward.1} parent=1 // pred_region
      _
    $region17: #{mlp_forward.1} parent=1 // pred_fallthru
      _
    // Predicated region
    $region18: #{mlp_forward.1} parent=1 // pred_check
      _
    $region19: #{mlp_forward.1} parent=1 // pred_check_branch
      %34 = sbr.rel (0) target = $region21
    $region20: #{mlp_forward.1} parent=1 // pred_region
      _
    $region21: #{mlp_forward.1} parent=1 // pred_fallthru
      _
    // Predicated region
    $region22: #{mlp_forward.1} parent=1 // pred_check
      _
    $region23: #{mlp_forward.1} parent=1 // pred_check_branch
      %36 = sbr.rel (0) target = $region25
    $region24: #{mlp_forward.1} parent=1 // pred_region
      _
    $region25: #{mlp_forward.1} parent=1 // pred_fallthru
      _
    // Predicated region
    $region26: #{mlp_forward.1} parent=1 // pred_check
      _
    $region27: #{mlp_forward.1} parent=1 // pred_check_branch
      %38 = sbr.rel (0) target = $region29
    $region28: #{mlp_forward.1} parent=1 // pred_region
      _
    $region29: #{mlp_forward.1} parent=1 // pred_fallthru
      _
    // Predicated region
    $region30: #{mlp_forward.1} parent=1 // pred_check
      _
    $region31: #{mlp_forward.1} parent=1 // pred_check_branch
      %40 = sbr.rel (0) target = $region33
    $region32: #{mlp_forward.1} parent=1 // pred_region
      _
    $region33: #{mlp_forward.1} parent=1 // pred_fallthru
      _
    // Predicated region
    $region34: #{mlp_forward.1} parent=1 // pred_check
      _
    $region35: #{mlp_forward.1} parent=1 // pred_check_branch
      %42 = sbr.rel (0) target = $region37
    $region36: #{mlp_forward.1} parent=1 // pred_region
      _
    $region37: #{mlp_forward.1} parent=1 // pred_fallthru
      _
    // Predicated region
    $region38: #{mlp_forward.1} parent=1 // pred_check
      _
    $region39: #{mlp_forward.1} parent=1 // pred_check_branch
      %44 = sbr.rel (0) target = $region41
    $region40: #{mlp_forward.1} parent=1 // pred_region
      %45 = dma.done [#allocation3], 128
    $region41: #{mlp_forward.1} parent=1 // pred_fallthru
      _
    %v47 = vld [vmem:[%s0] sm:$0xf]
    %v48 = vld [vmem:[%s0 + $0x4] sm:$0xf]
    %v49 = vld [vmem:[%s0 + $0x8] sm:$0xf]
    %v50 = vld [vmem:[%s0 + $0xc] sm:$0xf]
    %v51 = vld [vmem:[%s0 + $0x10] sm:$0xf]
    %v52 = vld [vmem:[%s0 + $0x14] sm:$0xf]
    %v53 = vld [vmem:[%s0 + $0x18] sm:$0xf]
    %v54 = vld [vmem:[%s0 + $0x1c] sm:$0xf]
    %v55 = vld [vmem:[%s0 + $0x20] sm:$0xf]
    %v56 = vld [vmem:[%s0 + $0x24] sm:$0xf]
    %v57 = vld [vmem:[%s0 + $0x28] sm:$0xf]
    %v58 = vld [vmem:[%s0 + $0x2c] sm:$0xf]
    %v59 = vld [vmem:[%s0 + $0x30] sm:$0xf]
    %v60 = vld [vmem:[%s0 + $0x34] sm:$0xf]
    %v61 = vld [vmem:[%s0 + $0x38] sm:$0xf]
    %v62 = vld [vmem:[%s0 + $0x3c] sm:$0xf]
    %v63 = vld [vmem:[#allocation2] sm:$0xf]
    %v64 = vld [vmem:[#allocation2 + $0x4] sm:$0xf]
    %v65 = vld [vmem:[%s2] sm:$0x1]
    %v67 = vlaneseq
    %v68 = vshrl.u32 %v67, 7
    %v69 = vsub.s32 0, %v68
    %v70 = vrot.slane %v65, %v69
    %v88 = vunpack.c.l.b16 %v47
    %v89 = vunpack.c.l.b16 %v48
    %v90 = vunpack.c.l.b16 %v49
    %v91 = vunpack.c.l.b16 %v50
    %v92 = vunpack.c.l.b16 %v51
    %v93 = vunpack.c.l.b16 %v52
    %v94 = vunpack.c.l.b16 %v53
    %v95 = vunpack.c.l.b16 %v54
    %v96 = vunpack.c.l.b16 %v55
    %v97 = vunpack.c.l.b16 %v56
    %v98 = vunpack.c.l.b16 %v57
    %v99 = vunpack.c.l.b16 %v58
    %v100 = vunpack.c.l.b16 %v59
    %v101 = vunpack.c.l.b16 %v60
    %v102 = vunpack.c.l.b16 %v61
    %v103 = vunpack.c.l.b16 %v62
    %v104 = vpack.c.b16 %v89, %v88
    %v105 = vpack.c.b16 %v91, %v90
    %v106 = vpack.c.b16 %v93, %v92
    %v107 = vpack.c.b16 %v95, %v94
    %v108 = vpack.c.b16 %v97, %v96
    %v109 = vpack.c.b16 %v99, %v98
    %v110 = vpack.c.b16 %v101, %v100
    %v111 = vpack.c.b16 %v103, %v102
    %v114 = vunpack.c.l.b16 %v63
    %v115 = vunpack.c.l.b16 %v64
    %v116 = vpack.c.b16 %v115, %v114
    %vm118 = vcmask 130048
    %v120 = vsel %vm118, %v104, 0
    %v123 = vsel %vm118, %v105, 0
    %v126 = vsel %vm118, %v106, 0
    %v129 = vsel %vm118, %v107, 0
    %v132 = vsel %vm118, %v108, 0
    %v135 = vsel %vm118, %v109, 0
    %v138 = vsel %vm118, %v110, 0
    %v141 = vsel %vm118, %v111, 0
    %143 = vmatprep.subr.bf16.mxu0 0
    %144 = vmatpush1.bf16.msra.mxu0 %v116
    %145 = vmatprep.subr.bf16.mxu0 0
    %146 = vmatpush1.bf16.msra.mxu0 0
    %147 = vmatprep.subr.bf16.mxu0 0
    %148 = vmatpush1.bf16.msra.mxu0 0
    %149 = vmatprep.subr.bf16.mxu0 0
    %150 = vmatpush1.bf16.msra.mxu0 0
    %151 = vmatprep.subr.bf16.mxu0 0
    %152 = vmatpush1.bf16.msra.mxu0 0
    %153 = vmatprep.subr.bf16.mxu0 0
    %154 = vmatpush1.bf16.msra.mxu0 0
    %155 = vmatprep.subr.bf16.mxu0 0
    %156 = vmatpush1.bf16.msra.mxu0 0
    %157 = vmatprep.subr.bf16.mxu0 0
    %158 = vmatpush1.bf16.msra.mxu0 0
    %159 = vmatprep.subr.bf16.mxu0 0
    %160 = vmatpush1.bf16.msra.mxu0 0
    %161 = vmatprep.subr.bf16.mxu0 0
    %162 = vmatpush1.bf16.msra.mxu0 0
    %163 = vmatprep.subr.bf16.mxu0 0
    %164 = vmatpush1.bf16.msra.mxu0 0
    %165 = vmatprep.subr.bf16.mxu0 0
    %166 = vmatpush1.bf16.msra.mxu0 0
    %167 = vmatprep.subr.bf16.mxu0 0
    %168 = vmatpush1.bf16.msra.mxu0 0
    %169 = vmatprep.subr.bf16.mxu0 0
    %170 = vmatpush1.bf16.msra.mxu0 0
    %171 = vmatprep.subr.bf16.mxu0 0
    %172 = vmatpush1.bf16.msra.mxu0 0
    %173 = vmatprep.subr.bf16.mxu0 0
    %174 = vmatpush1.bf16.msra.mxu0 0
    %175 = vmatprep.mubr.bf16.mxu0 0
    %176 = vmatmul.mubr.bf16.gmra.mrb[0].mxu0 %v120
    %v177 = vpop.f32.mrb[0].mxu0
    %v178 = vadd.f32 %v70, %v177
    %v179 = vpop.f32.mrb[0].mxu0
    %v180 = vpop.f32.mrb[0].mxu0
    %v181 = vadd.f32 %v70, %v180
    %v182 = vpop.f32.mrb[0].mxu0
    %183 = vmatprep.mubr.bf16.mxu0 0
    %184 = vmatmul.mubr.bf16.gmra.mrb[0].mxu0 %v123
    %v185 = vpop.f32.mrb[0].mxu0
    %v186 = vadd.f32 %v70, %v185
    %v187 = vpop.f32.mrb[0].mxu0
    %v188 = vpop.f32.mrb[0].mxu0
    %v189 = vadd.f32 %v70, %v188
    %v190 = vpop.f32.mrb[0].mxu0
    %191 = vmatprep.mubr.bf16.mxu0 0
    %192 = vmatmul.mubr.bf16.gmra.mrb[0].mxu0 %v126
    %v193 = vpop.f32.mrb[0].mxu0
    %v194 = vadd.f32 %v70, %v193
    %v195 = vpop.f32.mrb[0].mxu0
    %v196 = vpop.f32.mrb[0].mxu0
    %v197 = vadd.f32 %v70, %v196
    %v198 = vpop.f32.mrb[0].mxu0
    %199 = vmatprep.mubr.bf16.mxu0 0
    %200 = vmatmul.mubr.bf16.gmra.mrb[0].mxu0 %v129
    %v201 = vpop.f32.mrb[0].mxu0
    %v202 = vadd.f32 %v70, %v201
    %v203 = vpop.f32.mrb[0].mxu0
    %v204 = vpop.f32.mrb[0].mxu0
    %v205 = vadd.f32 %v70, %v204
    %v206 = vpop.f32.mrb[0].mxu0
    %207 = vmatprep.mubr.bf16.mxu0 0
    %208 = vmatmul.mubr.bf16.gmra.mrb[0].mxu0 %v132
    %v209 = vpop.f32.mrb[0].mxu0
    %v210 = vadd.f32 %v70, %v209
    %v211 = vpop.f32.mrb[0].mxu0
    %v212 = vpop.f32.mrb[0].mxu0
    %v213 = vadd.f32 %v70, %v212
    %v214 = vpop.f32.mrb[0].mxu0
    %215 = vmatprep.mubr.bf16.mxu0 0
    %216 = vmatmul.mubr.bf16.gmra.mrb[0].mxu0 %v135
    %v217 = vpop.f32.mrb[0].mxu0
    %v218 = vadd.f32 %v70, %v217
    %v219 = vpop.f32.mrb[0].mxu0
    %v220 = vpop.f32.mrb[0].mxu0
    %v221 = vadd.f32 %v70, %v220
    %v222 = vpop.f32.mrb[0].mxu0
    %223 = vmatprep.mubr.bf16.mxu0 0
    %224 = vmatmul.mubr.bf16.gmra.mrb[0].mxu0 %v138
    %v225 = vpop.f32.mrb[0].mxu0
    %v226 = vadd.f32 %v70, %v225
    %v227 = vpop.f32.mrb[0].mxu0
    %v228 = vpop.f32.mrb[0].mxu0
    %v229 = vadd.f32 %v70, %v228
    %v230 = vpop.f32.mrb[0].mxu0
    %231 = vmatprep.mubr.bf16.mxu0 0
    %232 = vmatmul.mubr.bf16.gmra.mrb[0].mxu0 %v141
    %v233 = vpop.f32.mrb[0].mxu0
    %v234 = vadd.f32 %v70, %v233
    %v235 = vpop.f32.mrb[0].mxu0
    %v236 = vpop.f32.mrb[0].mxu0
    %v237 = vadd.f32 %v70, %v236
    %v238 = vpop.f32.mrb[0].mxu0
    %239 = vdwg.mxu0
    %v240 = vmax.f32 %v178, 0.0
    %v241 = vmax.f32 %v181, 0.0
    %v242 = vmax.f32 %v186, 0.0
    %v243 = vmax.f32 %v189, 0.0
    %v244 = vmax.f32 %v194, 0.0
    %v245 = vmax.f32 %v197, 0.0
    %v246 = vmax.f32 %v202, 0.0
    %v247 = vmax.f32 %v205, 0.0
    %v248 = vmax.f32 %v210, 0.0
    %v249 = vmax.f32 %v213, 0.0
    %v250 = vmax.f32 %v218, 0.0
    %v251 = vmax.f32 %v221, 0.0
    %v252 = vmax.f32 %v226, 0.0
    %v253 = vmax.f32 %v229, 0.0
    %v254 = vmax.f32 %v234, 0.0
    %v255 = vmax.f32 %v237, 0.0
    %v256 = vpack.c.bf16 %v241, %v240
    %v257 = vpack.c.bf16 %v243, %v242
    %v258 = vpack.c.bf16 %v245, %v244
    %v259 = vpack.c.bf16 %v247, %v246
    %v260 = vpack.c.bf16 %v249, %v248
    %v261 = vpack.c.bf16 %v251, %v250
    %v262 = vpack.c.bf16 %v253, %v252
    %v263 = vpack.c.bf16 %v255, %v254
    %v264 = vld [vmem:[%s3] sm:$0xf]
    %v265 = vld [vmem:[%s3 + $0x4] sm:$0xf]
    %v266 = vld [vmem:[%s3 + $0x8] sm:$0xf]
    %v267 = vld [vmem:[%s3 + $0xc] sm:$0xf]
    %v268 = vld [vmem:[%s3 + $0x10] sm:$0xf]
    %v269 = vld [vmem:[%s3 + $0x14] sm:$0xf]
    %v270 = vld [vmem:[%s3 + $0x18] sm:$0xf]
    %v271 = vld [vmem:[%s3 + $0x1c] sm:$0xf]
    %v272 = vld [vmem:[%s3 + $0x20] sm:$0xf]
    %v273 = vld [vmem:[%s3 + $0x24] sm:$0xf]
    %v274 = vld [vmem:[%s3 + $0x28] sm:$0xf]
    %v275 = vld [vmem:[%s3 + $0x2c] sm:$0xf]
    %v276 = vld [vmem:[%s3 + $0x30] sm:$0xf]
    %v277 = vld [vmem:[%s3 + $0x34] sm:$0xf]
    %v278 = vld [vmem:[%s3 + $0x38] sm:$0xf]
    %v279 = vld [vmem:[%s3 + $0x3c] sm:$0xf]
    %v280 = vld [vmem:[%s4] sm:$0x1]
    %v282 = vlaneseq
    %v283 = vshrl.u32 %v282, 7
    %v284 = vsub.s32 0, %v283
    %v285 = vrot.slane %v280, %v284
    %v303 = vunpack.c.l.b16 %v264
    %v304 = vunpack.c.l.b16 %v265
    %v305 = vunpack.c.l.b16 %v266
    %v306 = vunpack.c.l.b16 %v267
    %v307 = vunpack.c.l.b16 %v268
    %v308 = vunpack.c.l.b16 %v269
    %v309 = vunpack.c.l.b16 %v270
    %v310 = vunpack.c.l.b16 %v271
    %v311 = vunpack.c.l.b16 %v272
    %v312 = vunpack.c.l.b16 %v273
    %v313 = vunpack.c.l.b16 %v274
    %v314 = vunpack.c.l.b16 %v275
    %v315 = vunpack.c.l.b16 %v276
    %v316 = vunpack.c.l.b16 %v277
    %v317 = vunpack.c.l.b16 %v278
    %v318 = vunpack.c.l.b16 %v279
    %v319 = vpack.c.b16 %v304, %v303
    %v320 = vpack.c.b16 %v306, %v305
    %v321 = vpack.c.b16 %v308, %v307
    %v322 = vpack.c.b16 %v310, %v309
    %v323 = vpack.c.b16 %v312, %v311
    %v324 = vpack.c.b16 %v314, %v313
    %v325 = vpack.c.b16 %v316, %v315
    %v326 = vpack.c.b16 %v318, %v317
    %335 = vmatprep.subr.bf16.mxu0 0
    %336 = vmatpush1.bf16.msra.mxu0 %v319
    %337 = vmatprep.subr.bf16.mxu0 0
    %338 = vmatpush1.bf16.msra.mxu0 %v320
    %339 = vmatprep.subr.bf16.mxu0 0
    %340 = vmatpush1.bf16.msra.mxu0 %v321
    %341 = vmatprep.subr.bf16.mxu0 0
    %342 = vmatpush1.bf16.msra.mxu0 %v322
    %343 = vmatprep.subr.bf16.mxu0 0
    %344 = vmatpush1.bf16.msra.mxu0 %v323
    %345 = vmatprep.subr.bf16.mxu0 0
    %346 = vmatpush1.bf16.msra.mxu0 %v324
    %347 = vmatprep.subr.bf16.mxu0 0
    %348 = vmatpush1.bf16.msra.mxu0 %v325
    %349 = vmatprep.subr.bf16.mxu0 0
    %350 = vmatpush1.bf16.msra.mxu0 %v326
    %351 = vmatprep.subr.bf16.mxu0 0
    %352 = vmatpush1.bf16.msra.mxu0 0
    %353 = vmatprep.subr.bf16.mxu0 0
    %354 = vmatpush1.bf16.msra.mxu0 0
    %355 = vmatprep.subr.bf16.mxu0 0
    %356 = vmatpush1.bf16.msra.mxu0 0
    %357 = vmatprep.subr.bf16.mxu0 0
    %358 = vmatpush1.bf16.msra.mxu0 0
    %359 = vmatprep.subr.bf16.mxu0 0
    %360 = vmatpush1.bf16.msra.mxu0 0
    %361 = vmatprep.subr.bf16.mxu0 0
    %362 = vmatpush1.bf16.msra.mxu0 0
    %363 = vmatprep.subr.bf16.mxu0 0
    %364 = vmatpush1.bf16.msra.mxu0 0
    %365 = vmatprep.subr.bf16.mxu0 0
    %366 = vmatpush1.bf16.msra.mxu0 0
    %367 = vmatprep.mubr.bf16.mxu0 0
    %368 = vmatmul.mubr.bf16.gmra.mrb[0].mxu0 %v256
    %v369 = vpop.f32.mrb[0].mxu0
    %v370 = vadd.f32 %v285, %v369
    %v371 = vpop.f32.mrb[0].mxu0
    %v372 = vpop.f32.mrb[0].mxu0
    %v373 = vadd.f32 %v285, %v372
    %v374 = vpop.f32.mrb[0].mxu0
    %375 = vmatprep.mubr.bf16.mxu0 0
    %376 = vmatmul.mubr.bf16.gmra.mrb[0].mxu0 %v257
    %v377 = vpop.f32.mrb[0].mxu0
    %v378 = vadd.f32 %v285, %v377
    %v379 = vpop.f32.mrb[0].mxu0
    %v380 = vpop.f32.mrb[0].mxu0
    %v381 = vadd.f32 %v285, %v380
    %v382 = vpop.f32.mrb[0].mxu0
    %383 = vmatprep.mubr.bf16.mxu0 0
    %384 = vmatmul.mubr.bf16.gmra.mrb[0].mxu0 %v258
    %v385 = vpop.f32.mrb[0].mxu0
    %v386 = vadd.f32 %v285, %v385
    %v387 = vpop.f32.mrb[0].mxu0
    %v388 = vpop.f32.mrb[0].mxu0
    %v389 = vadd.f32 %v285, %v388
    %v390 = vpop.f32.mrb[0].mxu0
    %391 = vmatprep.mubr.bf16.mxu0 0
    %392 = vmatmul.mubr.bf16.gmra.mrb[0].mxu0 %v259
    %v393 = vpop.f32.mrb[0].mxu0
    %v394 = vadd.f32 %v285, %v393
    %v395 = vpop.f32.mrb[0].mxu0
    %v396 = vpop.f32.mrb[0].mxu0
    %v397 = vadd.f32 %v285, %v396
    %v398 = vpop.f32.mrb[0].mxu0
    %399 = vmatprep.mubr.bf16.mxu0 0
    %400 = vmatmul.mubr.bf16.gmra.mrb[0].mxu0 %v260
    %v401 = vpop.f32.mrb[0].mxu0
    %v402 = vadd.f32 %v285, %v401
    %v403 = vpop.f32.mrb[0].mxu0
    %v404 = vpop.f32.mrb[0].mxu0
    %v405 = vadd.f32 %v285, %v404
    %v406 = vpop.f32.mrb[0].mxu0
    %407 = vmatprep.mubr.bf16.mxu0 0
    %408 = vmatmul.mubr.bf16.gmra.mrb[0].mxu0 %v261
    %v409 = vpop.f32.mrb[0].mxu0
    %v410 = vadd.f32 %v285, %v409
    %v411 = vpop.f32.mrb[0].mxu0
    %v412 = vpop.f32.mrb[0].mxu0
    %v413 = vadd.f32 %v285, %v412
    %v414 = vpop.f32.mrb[0].mxu0
    %415 = vmatprep.mubr.bf16.mxu0 0
    %416 = vmatmul.mubr.bf16.gmra.mrb[0].mxu0 %v262
    %v417 = vpop.f32.mrb[0].mxu0
    %v418 = vadd.f32 %v285, %v417
    %v419 = vpop.f32.mrb[0].mxu0
    %v420 = vpop.f32.mrb[0].mxu0
    %v421 = vadd.f32 %v285, %v420
    %v422 = vpop.f32.mrb[0].mxu0
    %423 = vmatprep.mubr.bf16.mxu0 0
    %424 = vmatmul.mubr.bf16.gmra.mrb[0].mxu0 %v263
    %v425 = vpop.f32.mrb[0].mxu0
    %v426 = vadd.f32 %v285, %v425
    %v427 = vpop.f32.mrb[0].mxu0
    %v428 = vpop.f32.mrb[0].mxu0
    %v429 = vadd.f32 %v285, %v428
    %v430 = vpop.f32.mrb[0].mxu0
    %431 = vdwg.mxu0
    %v432 = vmax.f32 %v370, 0.0
    %v433 = vmax.f32 %v373, 0.0
    %v434 = vmax.f32 %v378, 0.0
    %v435 = vmax.f32 %v381, 0.0
    %v436 = vmax.f32 %v386, 0.0
    %v437 = vmax.f32 %v389, 0.0
    %v438 = vmax.f32 %v394, 0.0
    %v439 = vmax.f32 %v397, 0.0
    %v440 = vmax.f32 %v402, 0.0
    %v441 = vmax.f32 %v405, 0.0
    %v442 = vmax.f32 %v410, 0.0
    %v443 = vmax.f32 %v413, 0.0
    %v444 = vmax.f32 %v418, 0.0
    %v445 = vmax.f32 %v421, 0.0
    %v446 = vmax.f32 %v426, 0.0
    %v447 = vmax.f32 %v429, 0.0
    %v448 = vpack.c.bf16 %v433, %v432
    %v449 = vpack.c.bf16 %v435, %v434
    %v450 = vpack.c.bf16 %v437, %v436
    %v451 = vpack.c.bf16 %v439, %v438
    %v452 = vpack.c.bf16 %v441, %v440
    %v453 = vpack.c.bf16 %v443, %v442
    %v454 = vpack.c.bf16 %v445, %v444
    %v455 = vpack.c.bf16 %v447, %v446
    %v456 = vld [vmem:[%s5] sm:$0xf]
    %v457 = vld [vmem:[%s5 + $0x4] sm:$0xf]
    %v458 = vld [vmem:[%s5 + $0x8] sm:$0xf]
    %v459 = vld [vmem:[%s5 + $0xc] sm:$0xf]
    %v460 = vld [vmem:[%s5 + $0x10] sm:$0xf]
    %v461 = vld [vmem:[%s5 + $0x14] sm:$0xf]
    %v462 = vld [vmem:[%s5 + $0x18] sm:$0xf]
    %v463 = vld [vmem:[%s5 + $0x1c] sm:$0xf]
    %v464 = vld [vmem:[%s5 + $0x20] sm:$0xf]
    %v465 = vld [vmem:[%s5 + $0x24] sm:$0xf]
    %v466 = vld [vmem:[%s5 + $0x28] sm:$0xf]
    %v467 = vld [vmem:[%s5 + $0x2c] sm:$0xf]
    %v468 = vld [vmem:[%s5 + $0x30] sm:$0xf]
    %v469 = vld [vmem:[%s5 + $0x34] sm:$0xf]
    %v470 = vld [vmem:[%s5 + $0x38] sm:$0xf]
    %v471 = vld [vmem:[%s5 + $0x3c] sm:$0xf]
    %v472 = vld [vmem:[%s6] sm:$0x1]
    %v474 = vlaneseq
    %v475 = vshrl.u32 %v474, 7
    %v476 = vsub.s32 0, %v475
    %v477 = vrot.slane %v472, %v476
    %v495 = vunpack.c.l.b16 %v456
    %v496 = vunpack.c.l.b16 %v457
    %v497 = vunpack.c.l.b16 %v458
    %v498 = vunpack.c.l.b16 %v459
    %v499 = vunpack.c.l.b16 %v460
    %v500 = vunpack.c.l.b16 %v461
    %v501 = vunpack.c.l.b16 %v462
    %v502 = vunpack.c.l.b16 %v463
    %v503 = vunpack.c.l.b16 %v464
    %v504 = vunpack.c.l.b16 %v465
    %v505 = vunpack.c.l.b16 %v466
    %v506 = vunpack.c.l.b16 %v467
    %v507 = vunpack.c.l.b16 %v468
    %v508 = vunpack.c.l.b16 %v469
    %v509 = vunpack.c.l.b16 %v470
    %v510 = vunpack.c.l.b16 %v471
    %v511 = vpack.c.b16 %v496, %v495
    %v512 = vpack.c.b16 %v498, %v497
    %v513 = vpack.c.b16 %v500, %v499
    %v514 = vpack.c.b16 %v502, %v501
    %v515 = vpack.c.b16 %v504, %v503
    %v516 = vpack.c.b16 %v506, %v505
    %v517 = vpack.c.b16 %v508, %v507
    %v518 = vpack.c.b16 %v510, %v509
    %527 = vmatprep.subr.bf16.mxu0 0
    %528 = vmatpush1.bf16.msra.mxu0 %v511
    %529 = vmatprep.subr.bf16.mxu0 0
    %530 = vmatpush1.bf16.msra.mxu0 %v512
    %531 = vmatprep.subr.bf16.mxu0 0
    %532 = vmatpush1.bf16.msra.mxu0 %v513
    %533 = vmatprep.subr.bf16.mxu0 0
    %534 = vmatpush1.bf16.msra.mxu0 %v514
    %535 = vmatprep.subr.bf16.mxu0 0
    %536 = vmatpush1.bf16.msra.mxu0 %v515
    %537 = vmatprep.subr.bf16.mxu0 0
    %538 = vmatpush1.bf16.msra.mxu0 %v516
    %539 = vmatprep.subr.bf16.mxu0 0
    %540 = vmatpush1.bf16.msra.mxu0 %v517
    %541 = vmatprep.subr.bf16.mxu0 0
    %542 = vmatpush1.bf16.msra.mxu0 %v518
    %543 = vmatprep.subr.bf16.mxu0 0
    %544 = vmatpush1.bf16.msra.mxu0 0
    %545 = vmatprep.subr.bf16.mxu0 0
    %546 = vmatpush1.bf16.msra.mxu0 0
    %547 = vmatprep.subr.bf16.mxu0 0
    %548 = vmatpush1.bf16.msra.mxu0 0
    %549 = vmatprep.subr.bf16.mxu0 0
    %550 = vmatpush1.bf16.msra.mxu0 0
    %551 = vmatprep.subr.bf16.mxu0 0
    %552 = vmatpush1.bf16.msra.mxu0 0
    %553 = vmatprep.subr.bf16.mxu0 0
    %554 = vmatpush1.bf16.msra.mxu0 0
    %555 = vmatprep.subr.bf16.mxu0 0
    %556 = vmatpush1.bf16.msra.mxu0 0
    %557 = vmatprep.subr.bf16.mxu0 0
    %558 = vmatpush1.bf16.msra.mxu0 0
    %559 = vmatprep.mubr.bf16.mxu0 0
    %560 = vmatmul.mubr.bf16.gmra.mrb[0].mxu0 %v448
    %v561 = vpop.f32.mrb[0].mxu0
    %v562 = vadd.f32 %v477, %v561
    %v563 = vpop.f32.mrb[0].mxu0
    %v564 = vpop.f32.mrb[0].mxu0
    %v565 = vadd.f32 %v477, %v564
    %v566 = vpop.f32.mrb[0].mxu0
    %567 = vmatprep.mubr.bf16.mxu0 0
    %568 = vmatmul.mubr.bf16.gmra.mrb[0].mxu0 %v449
    %v569 = vpop.f32.mrb[0].mxu0
    %v570 = vadd.f32 %v477, %v569
    %v571 = vpop.f32.mrb[0].mxu0
    %v572 = vpop.f32.mrb[0].mxu0
    %v573 = vadd.f32 %v477, %v572
    %v574 = vpop.f32.mrb[0].mxu0
    %575 = vmatprep.mubr.bf16.mxu0 0
    %576 = vmatmul.mubr.bf16.gmra.mrb[0].mxu0 %v450
    %v577 = vpop.f32.mrb[0].mxu0
    %v578 = vadd.f32 %v477, %v577
    %v579 = vpop.f32.mrb[0].mxu0
    %v580 = vpop.f32.mrb[0].mxu0
    %v581 = vadd.f32 %v477, %v580
    %v582 = vpop.f32.mrb[0].mxu0
    %583 = vmatprep.mubr.bf16.mxu0 0
    %584 = vmatmul.mubr.bf16.gmra.mrb[0].mxu0 %v451
    %v585 = vpop.f32.mrb[0].mxu0
    %v586 = vadd.f32 %v477, %v585
    %v587 = vpop.f32.mrb[0].mxu0
    %v588 = vpop.f32.mrb[0].mxu0
    %v589 = vadd.f32 %v477, %v588
    %v590 = vpop.f32.mrb[0].mxu0
    %591 = vmatprep.mubr.bf16.mxu0 0
    %592 = vmatmul.mubr.bf16.gmra.mrb[0].mxu0 %v452
    %v593 = vpop.f32.mrb[0].mxu0
    %v594 = vadd.f32 %v477, %v593
    %v595 = vpop.f32.mrb[0].mxu0
    %v596 = vpop.f32.mrb[0].mxu0
    %v597 = vadd.f32 %v477, %v596
    %v598 = vpop.f32.mrb[0].mxu0
    %599 = vmatprep.mubr.bf16.mxu0 0
    %600 = vmatmul.mubr.bf16.gmra.mrb[0].mxu0 %v453
    %v601 = vpop.f32.mrb[0].mxu0
    %v602 = vadd.f32 %v477, %v601
    %v603 = vpop.f32.mrb[0].mxu0
    %v604 = vpop.f32.mrb[0].mxu0
    %v605 = vadd.f32 %v477, %v604
    %v606 = vpop.f32.mrb[0].mxu0
    %607 = vmatprep.mubr.bf16.mxu0 0
    %608 = vmatmul.mubr.bf16.gmra.mrb[0].mxu0 %v454
    %v609 = vpop.f32.mrb[0].mxu0
    %v610 = vadd.f32 %v477, %v609
    %v611 = vpop.f32.mrb[0].mxu0
    %v612 = vpop.f32.mrb[0].mxu0
    %v613 = vadd.f32 %v477, %v612
    %v614 = vpop.f32.mrb[0].mxu0
    %615 = vmatprep.mubr.bf16.mxu0 0
    %616 = vmatmul.mubr.bf16.gmra.mrb[0].mxu0 %v455
    %v617 = vpop.f32.mrb[0].mxu0
    %v618 = vadd.f32 %v477, %v617
    %v619 = vpop.f32.mrb[0].mxu0
    %v620 = vpop.f32.mrb[0].mxu0
    %v621 = vadd.f32 %v477, %v620
    %v622 = vpop.f32.mrb[0].mxu0
    %623 = vdwg.mxu0
    %v624 = vmax.f32 %v562, 0.0
    %v625 = vmax.f32 %v565, 0.0
    %v626 = vmax.f32 %v570, 0.0
    %v627 = vmax.f32 %v573, 0.0
    %v628 = vmax.f32 %v578, 0.0
    %v629 = vmax.f32 %v581, 0.0
    %v630 = vmax.f32 %v586, 0.0
    %v631 = vmax.f32 %v589, 0.0
    %v632 = vmax.f32 %v594, 0.0
    %v633 = vmax.f32 %v597, 0.0
    %v634 = vmax.f32 %v602, 0.0
    %v635 = vmax.f32 %v605, 0.0
    %v636 = vmax.f32 %v610, 0.0
    %v637 = vmax.f32 %v613, 0.0
    %v638 = vmax.f32 %v618, 0.0
    %v639 = vmax.f32 %v621, 0.0
    %v640 = vpack.c.bf16 %v625, %v624
    %v641 = vpack.c.bf16 %v627, %v626
    %v642 = vpack.c.bf16 %v629, %v628
    %v643 = vpack.c.bf16 %v631, %v630
    %v644 = vpack.c.bf16 %v633, %v632
    %v645 = vpack.c.bf16 %v635, %v634
    %v646 = vpack.c.bf16 %v637, %v636
    %v647 = vpack.c.bf16 %v639, %v638
    %v648 = vld [vmem:[%s7] sm:$0xf]
    %v649 = vld [vmem:[%s7 + $0x4] sm:$0xf]
    %v650 = vld [vmem:[%s7 + $0x8] sm:$0xf]
    %v651 = vld [vmem:[%s7 + $0xc] sm:$0xf]
    %v652 = vld [vmem:[%s7 + $0x10] sm:$0xf]
    %v653 = vld [vmem:[%s7 + $0x14] sm:$0xf]
    %v654 = vld [vmem:[%s7 + $0x18] sm:$0xf]
    %v655 = vld [vmem:[%s7 + $0x1c] sm:$0xf]
    %v656 = vld [vmem:[%s7 + $0x20] sm:$0xf]
    %v657 = vld [vmem:[%s7 + $0x24] sm:$0xf]
    %v658 = vld [vmem:[%s7 + $0x28] sm:$0xf]
    %v659 = vld [vmem:[%s7 + $0x2c] sm:$0xf]
    %v660 = vld [vmem:[%s7 + $0x30] sm:$0xf]
    %v661 = vld [vmem:[%s7 + $0x34] sm:$0xf]
    %v662 = vld [vmem:[%s7 + $0x38] sm:$0xf]
    %v663 = vld [vmem:[%s7 + $0x3c] sm:$0xf]
    %v664 = vld [vmem:[%s8] sm:$0x1]
    %v666 = vlaneseq
    %v667 = vshrl.u32 %v666, 7
    %v668 = vsub.s32 0, %v667
    %v669 = vrot.slane %v664, %v668
    %v687 = vunpack.c.l.b16 %v648
    %v688 = vunpack.c.l.b16 %v649
    %v689 = vunpack.c.l.b16 %v650
    %v690 = vunpack.c.l.b16 %v651
    %v691 = vunpack.c.l.b16 %v652
    %v692 = vunpack.c.l.b16 %v653
    %v693 = vunpack.c.l.b16 %v654
    %v694 = vunpack.c.l.b16 %v655
    %v695 = vunpack.c.l.b16 %v656
    %v696 = vunpack.c.l.b16 %v657
    %v697 = vunpack.c.l.b16 %v658
    %v698 = vunpack.c.l.b16 %v659
    %v699 = vunpack.c.l.b16 %v660
    %v700 = vunpack.c.l.b16 %v661
    %v701 = vunpack.c.l.b16 %v662
    %v702 = vunpack.c.l.b16 %v663
    %v703 = vpack.c.b16 %v688, %v687
    %v704 = vpack.c.b16 %v690, %v689
    %v705 = vpack.c.b16 %v692, %v691
    %v706 = vpack.c.b16 %v694, %v693
    %v707 = vpack.c.b16 %v696, %v695
    %v708 = vpack.c.b16 %v698, %v697
    %v709 = vpack.c.b16 %v700, %v699
    %v710 = vpack.c.b16 %v702, %v701
    %719 = vmatprep.subr.bf16.mxu0 0
    %720 = vmatpush1.bf16.msra.mxu0 %v703
    %721 = vmatprep.subr.bf16.mxu0 0
    %722 = vmatpush1.bf16.msra.mxu0 %v704
    %723 = vmatprep.subr.bf16.mxu0 0
    %724 = vmatpush1.bf16.msra.mxu0 %v705
    %725 = vmatprep.subr.bf16.mxu0 0
    %726 = vmatpush1.bf16.msra.mxu0 %v706
    %727 = vmatprep.subr.bf16.mxu0 0
    %728 = vmatpush1.bf16.msra.mxu0 %v707
    %729 = vmatprep.subr.bf16.mxu0 0
    %730 = vmatpush1.bf16.msra.mxu0 %v708
    %731 = vmatprep.subr.bf16.mxu0 0
    %732 = vmatpush1.bf16.msra.mxu0 %v709
    %733 = vmatprep.subr.bf16.mxu0 0
    %734 = vmatpush1.bf16.msra.mxu0 %v710
    %735 = vmatprep.subr.bf16.mxu0 0
    %736 = vmatpush1.bf16.msra.mxu0 0
    %737 = vmatprep.subr.bf16.mxu0 0
    %738 = vmatpush1.bf16.msra.mxu0 0
    %739 = vmatprep.subr.bf16.mxu0 0
    %740 = vmatpush1.bf16.msra.mxu0 0
    %741 = vmatprep.subr.bf16.mxu0 0
    %742 = vmatpush1.bf16.msra.mxu0 0
    %743 = vmatprep.subr.bf16.mxu0 0
    %744 = vmatpush1.bf16.msra.mxu0 0
    %745 = vmatprep.subr.bf16.mxu0 0
    %746 = vmatpush1.bf16.msra.mxu0 0
    %747 = vmatprep.subr.bf16.mxu0 0
    %748 = vmatpush1.bf16.msra.mxu0 0
    %749 = vmatprep.subr.bf16.mxu0 0
    %750 = vmatpush1.bf16.msra.mxu0 0
    %751 = vmatprep.mubr.bf16.mxu0 0
    %752 = vmatmul.mubr.bf16.gmra.mrb[0].mxu0 %v640
    %v753 = vpop.f32.mrb[0].mxu0
    %v754 = vadd.f32 %v669, %v753
    %v755 = vpop.f32.mrb[0].mxu0
    %v756 = vpop.f32.mrb[0].mxu0
    %v757 = vadd.f32 %v669, %v756
    %v758 = vpop.f32.mrb[0].mxu0
    %759 = vmatprep.mubr.bf16.mxu0 0
    %760 = vmatmul.mubr.bf16.gmra.mrb[0].mxu0 %v641
    %v761 = vpop.f32.mrb[0].mxu0
    %v762 = vadd.f32 %v669, %v761
    %v763 = vpop.f32.mrb[0].mxu0
    %v764 = vpop.f32.mrb[0].mxu0
    %v765 = vadd.f32 %v669, %v764
    %v766 = vpop.f32.mrb[0].mxu0
    %767 = vmatprep.mubr.bf16.mxu0 0
    %768 = vmatmul.mubr.bf16.gmra.mrb[0].mxu0 %v642
    %v769 = vpop.f32.mrb[0].mxu0
    %v770 = vadd.f32 %v669, %v769
    %v771 = vpop.f32.mrb[0].mxu0
    %v772 = vpop.f32.mrb[0].mxu0
    %v773 = vadd.f32 %v669, %v772
    %v774 = vpop.f32.mrb[0].mxu0
    %775 = vmatprep.mubr.bf16.mxu0 0
    %776 = vmatmul.mubr.bf16.gmra.mrb[0].mxu0 %v643
    %v777 = vpop.f32.mrb[0].mxu0
    %v778 = vadd.f32 %v669, %v777
    %v779 = vpop.f32.mrb[0].mxu0
    %v780 = vpop.f32.mrb[0].mxu0
    %v781 = vadd.f32 %v669, %v780
    %v782 = vpop.f32.mrb[0].mxu0
    %783 = vmatprep.mubr.bf16.mxu0 0
    %784 = vmatmul.mubr.bf16.gmra.mrb[0].mxu0 %v644
    %v785 = vpop.f32.mrb[0].mxu0
    %v786 = vadd.f32 %v669, %v785
    %v787 = vpop.f32.mrb[0].mxu0
    %v788 = vpop.f32.mrb[0].mxu0
    %v789 = vadd.f32 %v669, %v788
    %v790 = vpop.f32.mrb[0].mxu0
    %791 = vmatprep.mubr.bf16.mxu0 0
    %792 = vmatmul.mubr.bf16.gmra.mrb[0].mxu0 %v645
    %v793 = vpop.f32.mrb[0].mxu0
    %v794 = vadd.f32 %v669, %v793
    %v795 = vpop.f32.mrb[0].mxu0
    %v796 = vpop.f32.mrb[0].mxu0
    %v797 = vadd.f32 %v669, %v796
    %v798 = vpop.f32.mrb[0].mxu0
    %799 = vmatprep.mubr.bf16.mxu0 0
    %800 = vmatmul.mubr.bf16.gmra.mrb[0].mxu0 %v646
    %v801 = vpop.f32.mrb[0].mxu0
    %v802 = vadd.f32 %v669, %v801
    %v803 = vpop.f32.mrb[0].mxu0
    %v804 = vpop.f32.mrb[0].mxu0
    %v805 = vadd.f32 %v669, %v804
    %v806 = vpop.f32.mrb[0].mxu0
    %807 = vmatprep.mubr.bf16.mxu0 0
    %808 = vmatmul.mubr.bf16.gmra.mrb[0].mxu0 %v647
    %v809 = vpop.f32.mrb[0].mxu0
    %v810 = vadd.f32 %v669, %v809
    %v811 = vpop.f32.mrb[0].mxu0
    %v812 = vpop.f32.mrb[0].mxu0
    %v813 = vadd.f32 %v669, %v812
    %v814 = vpop.f32.mrb[0].mxu0
    %815 = vdwg.mxu0
    %816 = vst [vmem:[%s9] sm:$0xff] %v754
    %817 = vst [vmem:[%s9 + $0x8] sm:$0xff] %v757
    %818 = vst [vmem:[%s9 + $0x10] sm:$0xff] %v762
    %819 = vst [vmem:[%s9 + $0x18] sm:$0xff] %v765
    %820 = vst [vmem:[%s9 + $0x20] sm:$0xff] %v770
    %821 = vst [vmem:[%s9 + $0x28] sm:$0xff] %v773
    %822 = vst [vmem:[%s9 + $0x30] sm:$0xff] %v778
    %823 = vst [vmem:[%s9 + $0x38] sm:$0xff] %v781
    %824 = vst [vmem:[%s9 + $0x40] sm:$0xff] %v786
    %825 = vst [vmem:[%s9 + $0x48] sm:$0xff] %v789
    %826 = vst [vmem:[%s9 + $0x50] sm:$0xff] %v794
    %827 = vst [vmem:[%s9 + $0x58] sm:$0xff] %v797
    %828 = vst [vmem:[%s9 + $0x60] sm:$0xff] %v802
    %829 = vst [vmem:[%s9 + $0x68] sm:$0xff] %v805
    %830 = vst [vmem:[%s9 + $0x70] sm:$0xff] %v810
    %831 = vst [vmem:[%s9 + $0x78] sm:$0xff] %v813
    // Predicated region
    $region42: #{mlp_forward.1} parent=1 // pred_check
      _
    $region43: #{mlp_forward.1} parent=1 // pred_check_branch
      %833 = sbr.rel (0) target = $region45
    $region44: #{mlp_forward.1} parent=1 // pred_region
      _
    $region45: #{mlp_forward.1} parent=1 // pred_fallthru
      _
    // Predicated region
    $region46: #{mlp_forward.1} parent=1 // pred_check
      _
    $region47: #{mlp_forward.1} parent=1 // pred_check_branch
      %835 = sbr.rel (0) target = $region49
    $region48: #{mlp_forward.1} parent=1 // pred_region
      _
    $region49: #{mlp_forward.1} parent=1 // pred_fallthru
      _
    %836 = vsyncpa [#allocation3], 1

</llo_original>
